<compile_context>
chip_gen: v7x
topology: tpu7x:2x2x1
jax: 0.10.0
libtpu: 0.0.40
codegen_flags: <defaults>
</compile_context>

<pallas_src>
import functools

import jax
import jax.numpy as jnp
from jax.experimental import pallas as pl
from jax.experimental.pallas import tpu as pltpu


def _conv_stats_kernel(x_ref, w_ref, conv_ref, psum_ref, psq_ref):
    """Pass 1: conv1d(k=3, p=1) for one batch element + per-channel partial stats.

    x_ref   : (L, C_in)        f32  native (length, channel) layout
    w_ref   : (3, C_out, C_in) bf16 tap-major conv weight
    conv_ref: (C_out, L)       f32  conv output (PyTorch NCL layout)
    psum_ref: (C_out, 1)       f32  sum over L of conv
    psq_ref : (C_out, 1)       f32  sum over L of conv^2
    """
    L, _ = x_ref.shape
    C_out = w_ref.shape[1]

    # In-kernel NCL transpose (XLU) + bf16 cast for the MXU; no HBM pass needed.
    xt = jnp.transpose(x_ref[...]).astype(jnp.bfloat16)               # (C_in, L)

    y0 = jnp.dot(w_ref[0], xt, preferred_element_type=jnp.float32)    # tap k=0
    y1 = jnp.dot(w_ref[1], xt, preferred_element_type=jnp.float32)    # tap k=1
    y2 = jnp.dot(w_ref[2], xt, preferred_element_type=jnp.float32)    # tap k=2

    # conv[:, l] = y0[:, l-1] + y1[:, l] + y2[:, l+1], zero outside [0, L) (padding=1).
    # pltpu.roll requires shift >= 0: a left rotation by 1 is a circular rotation
    # by L-1; the wrapped column is masked off, so the result is identical.
    col = jax.lax.broadcasted_iota(jnp.int32, (C_out, L), 1)
    y0_prev = pltpu.roll(y0, shift=1, axis=1)        # y0_prev[:, l] = y0[:, l-1] (wrap at l=0)
    y2_next = pltpu.roll(y2, shift=L - 1, axis=1)    # y2_next[:, l] = y2[:, l+1] (wrap at l=L-1)
    conv = (jnp.where(col >= 1, y0_prev, 0.0)
            + y1
            + jnp.where(col <= L - 2, y2_next, 0.0))
    # Conv bias omitted: BN's mean subtraction cancels a per-channel constant exactly.

    conv_ref[...] = conv
    psum_ref[...] = jnp.sum(conv, axis=1, keepdims=True)
    psq_ref[...] = jnp.sum(conv * conv, axis=1, keepdims=True)


def _bn_act_res_kernel(conv_ref, res_ref, scale_ref, shift_ref, out_ref):
    """Pass 2: y = relu(conv*scale + shift) + residual, for one batch element.

    conv_ref : (C_out, L) f32
    res_ref  : (L, C_in)  f32  original x; added elementwise exactly as PyTorch's
                               degenerate (B,C_out,L)+(B,L,C_in) broadcast (C_in==C_out==L)
    scale_ref: (C_out, 1) f32  gamma * rsqrt(var + eps)
    shift_ref: (C_out, 1) f32  beta - mu * scale
    out_ref  : (C_out, L) f32
    """
    y = conv_ref[...] * scale_ref[...] + shift_ref[...]
    y = jnp.maximum(y, 0.0)                       # activation = ReLU
    # Dropout1d: inference-mode identity.
    out_ref[...] = (y + res_ref[...]).astype(out_ref.dtype)


def _compiler_params(per_step_block_bytes):
    # Double-buffered pipeline blocks + headroom for in-kernel temporaries;
    # clamped so the scoped limit also fits v7x's 64 MiB physical VMEM.
    limit = int(4 * per_step_block_bytes) + (8 << 20)
    limit = max(16 << 20, min(limit, 48 << 20))
    return pltpu.CompilerParams(
        dimension_semantics=("parallel",),   # batch steps independent -> 2 TCs on v7x
        vmem_limit_bytes=limit,
    )


@functools.partial(jax.jit, static_argnames=("batch_size", "seq_len", "input_size"))
def cnn_layer_forward(x, conv_w, conv_b, bn_gamma, bn_beta, *,
                      batch_size, seq_len, input_size):
    """x: (batch_size, seq_len, input_size) — the module's reshape target.

    Returns (batch_size, C_out, seq_len) f32, matching the PyTorch forward.
    """
    del conv_b  # exactly cancelled by BN's mean subtraction (and zero-initialized).

    B, L, C_in = batch_size, seq_len, input_size
    C_out = conv_w.shape[0]
    if not (C_in == C_out == L):
        # The module's residual add broadcasts (B,C_out,L)+(B,L,C_in); only valid here.
        raise ValueError("cnn_layer residual broadcast requires input_size == "
                         "output_size == seq_len")

    x = x.reshape(B, L, C_in)                                       # module's reshape
    w_taps = jnp.transpose(conv_w, (2, 0, 1)).astype(jnp.bfloat16)  # (3, C_out, C_in)

    # ---------------- pass 1: conv + per-batch partial BN stats ----------------
    blk1 = 4 * L * C_in + 2 * 3 * C_out * C_in + 4 * C_out * L + 8 * C_out
    conv, psum, psq = pl.pallas_call(
        _conv_stats_kernel,
        grid=(B,),
        in_specs=[
            pl.BlockSpec((None, L, C_in), lambda b: (b, 0, 0)),
            pl.BlockSpec((3, C_out, C_in), lambda b: (0, 0, 0)),
        ],
        out_specs=(
            pl.BlockSpec((None, C_out, L), lambda b: (b, 0, 0)),
            pl.BlockSpec((None, C_out, 1), lambda b: (b, 0, 0)),
            pl.BlockSpec((None, C_out, 1), lambda b: (b, 0, 0)),
        ),
        out_shape=(
            jax.ShapeDtypeStruct((B, C_out, L), jnp.float32),
            jax.ShapeDtypeStruct((B, C_out, 1), jnp.float32),
            jax.ShapeDtypeStruct((B, C_out, 1), jnp.float32),
        ),
        compiler_params=_compiler_params(blk1),
    )(x, w_taps)

    # ---- tiny cross-batch stat reduction + BN affine folding (plain JAX) ----
    n = B * L
    mu = jnp.sum(psum, axis=(0, 2)) / n                          # (C_out,)
    var = jnp.sum(psq, axis=(0, 2)) / n - mu * mu                # biased (train mode)
    inv = jax.lax.rsqrt(var + 1e-5)
    scale = (bn_gamma * inv).reshape(C_out, 1).astype(jnp.float32)
    shift = (bn_beta - mu * bn_gamma * inv).reshape(C_out, 1).astype(jnp.float32)

    # ---------------- pass 2: normalize + ReLU + residual ----------------
    blk2 = 4 * C_out * L + 4 * L * C_in + 4 * C_out * L + 8 * C_out
    out = pl.pallas_call(
        _bn_act_res_kernel,
        grid=(B,),
        in_specs=[
            pl.BlockSpec((None, C_out, L), lambda b: (b, 0, 0)),
            pl.BlockSpec((None, L, C_in), lambda b: (b, 0, 0)),
            pl.BlockSpec((C_out, 1), lambda b: (0, 0)),
            pl.BlockSpec((C_out, 1), lambda b: (0, 0)),
        ],
        out_specs=pl.BlockSpec((None, C_out, L), lambda b: (b, 0, 0)),
        out_shape=jax.ShapeDtypeStruct((B, C_out, L), jnp.float32),
        compiler_params=_compiler_params(blk2),
    )(conv, x, scale, shift)
    return out


def _reference(x, conv_w, conv_b, bn_gamma, bn_beta):
    """Pure-JAX reference with the same precision policy (bf16 MXU operands)."""
    B, L, C_in = x.shape
    xp = jnp.transpose(x, (0, 2, 1))                              # (B, C_in, L)
    xpad = jnp.pad(xp, ((0, 0), (0, 0), (1, 1)))
    xb = xpad.astype(jnp.bfloat16)
    wb = conv_w.astype(jnp.bfloat16)
    conv = conv_b[None, :, None] + sum(
        jnp.einsum("oc,bcl->bol", wb[:, :, k], xb[:, :, k:k + L],
                   preferred_element_type=jnp.float32)
        for k in range(3))
    mu = jnp.mean(conv, axis=(0, 2), keepdims=True)
    var = jnp.mean((conv - mu) ** 2, axis=(0, 2), keepdims=True)
    y = (conv - mu) * jax.lax.rsqrt(var + 1e-5)
    y = y * bn_gamma[None, :, None] + bn_beta[None, :, None]
    y = jnp.maximum(y, 0.0)
    return y + x        # degenerate broadcast: shapes coincide since C_in == C_out == L


if __name__ == "__main__":
    # Small shapes: batch=2, seq_len=16, input_size=output_size=16
    # (C_in == C_out == seq_len is required by the module's residual broadcast).
    B, L, C = 2, 16, 16

    key = jax.random.PRNGKey(0)
    kx, kw = jax.random.split(key)

    x = jax.random.normal(kx, (B, L, C), dtype=jnp.float32)

    # Conv1d(C, C, kernel_size=3): xavier_uniform_ weight, zero bias (reset_parameters).
    fan_in = fan_out = C * 3
    bound = (6.0 / (fan_in + fan_out)) ** 0.5
    conv_w = jax.random.uniform(kw, (C, C, 3), minval=-bound, maxval=bound,
                                dtype=jnp.float32)
    conv_b = jnp.zeros((C,), jnp.float32)
    bn_gamma = jnp.ones((C,), jnp.float32)
    bn_beta = jnp.zeros((C,), jnp.float32)

    out = cnn_layer_forward(x, conv_w, conv_b, bn_gamma, bn_beta,
                            batch_size=B, seq_len=L, input_size=C)
    out = jax.block_until_ready(out)

    ref = _reference(x, conv_w, conv_b, bn_gamma, bn_beta)
    assert out.shape == (B, C, L)
    err = float(jnp.max(jnp.abs(out - ref)))
    assert jnp.allclose(out, ref, rtol=2e-3, atol=2e-3), f"mismatch vs reference: {err}"

    print("KERNEL_OK")
</pallas_src>

<mosaic_0001>
module attributes {stable_mosaic.version = 11 : i64} {
  func.func @_conv_stats_kernel(%arg0: i32, %arg1: memref<1x16x16xf32, #tpu.memory_space<vmem>>, %arg2: memref<3x16x16xbf16, #tpu.memory_space<vmem>>, %arg3: memref<1x16x16xf32, #tpu.memory_space<vmem>>, %arg4: memref<1x16x1xf32, #tpu.memory_space<vmem>>, %arg5: memref<1x16x1xf32, #tpu.memory_space<vmem>>) attributes {dimension_semantics = [#tpu.dimension_semantics<parallel>], iteration_bounds = array<i64: 2>, scalar_prefetch = 0 : i64, scratch_operands = 0 : i64, tpu.core_type = #tpu.core_type<tc>, window_params = [{transform_indices = @transform_0, window_bounds = array<i64: 1, 16, 16>}, {pipeline_mode = #tpu.pipeline_mode<synchronous>, transform_indices = @transform_1, window_bounds = array<i64: 3, 16, 16>}, {transform_indices = @transform_2, window_bounds = array<i64: 1, 16, 16>}, {transform_indices = @transform_3, window_bounds = array<i64: 1, 16, 1>}, {transform_indices = @transform_4, window_bounds = array<i64: 1, 16, 1>}]} {
    %c0 = arith.constant 0 : index
    %c0_0 = arith.constant 0 : index
    %c0_1 = arith.constant 0 : index
    %0 = vector.load %arg1[%c0, %c0_0, %c0_1] : memref<1x16x16xf32, #tpu.memory_space<vmem>>, vector<1x16x16xf32>
    %1 = vector.shape_cast %0 : vector<1x16x16xf32> to vector<16x16xf32>
    %2 = tpu.transpose %1, [1, 0] : vector<16x16xf32> -> vector<16x16xf32>
    %3 = arith.truncf %2 : vector<16x16xf32> to vector<16x16xbf16>
    %c0_2 = arith.constant 0 : index
    %c0_3 = arith.constant 0 : index
    %c0_4 = arith.constant 0 : index
    %4 = vector.load %arg2[%c0_2, %c0_3, %c0_4] : memref<3x16x16xbf16, #tpu.memory_space<vmem>>, vector<1x16x16xbf16>
    %5 = vector.shape_cast %4 : vector<1x16x16xbf16> to vector<16x16xbf16>
    %cst = arith.constant dense<0.000000e+00> : vector<16x16xf32>
    %6 = tpu.matmul %5, %3, %cst {dimension_numbers = #tpu.dot_dimension_numbers<[1], [0], [0], [1], [0, 0, 1, 1], [], []>} : vector<16x16xbf16>, vector<16x16xbf16>, vector<16x16xf32> -> vector<16x16xf32>
    %c1 = arith.constant 1 : index
    %c0_5 = arith.constant 0 : index
    %c0_6 = arith.constant 0 : index
    %7 = vector.load %arg2[%c1, %c0_5, %c0_6] : memref<3x16x16xbf16, #tpu.memory_space<vmem>>, vector<1x16x16xbf16>
    %8 = vector.shape_cast %7 : vector<1x16x16xbf16> to vector<16x16xbf16>
    %cst_7 = arith.constant dense<0.000000e+00> : vector<16x16xf32>
    %9 = tpu.matmul %8, %3, %cst_7 {dimension_numbers = #tpu.dot_dimension_numbers<[1], [0], [0], [1], [0, 0, 1, 1], [], []>} : vector<16x16xbf16>, vector<16x16xbf16>, vector<16x16xf32> -> vector<16x16xf32>
    %c2 = arith.constant 2 : index
    %c0_8 = arith.constant 0 : index
    %c0_9 = arith.constant 0 : index
    %10 = vector.load %arg2[%c2, %c0_8, %c0_9] : memref<3x16x16xbf16, #tpu.memory_space<vmem>>, vector<1x16x16xbf16>
    %11 = vector.shape_cast %10 : vector<1x16x16xbf16> to vector<16x16xbf16>
    %cst_10 = arith.constant dense<0.000000e+00> : vector<16x16xf32>
    %12 = tpu.matmul %11, %3, %cst_10 {dimension_numbers = #tpu.dot_dimension_numbers<[1], [0], [0], [1], [0, 0, 1, 1], [], []>} : vector<16x16xbf16>, vector<16x16xbf16>, vector<16x16xf32> -> vector<16x16xf32>
    %13 = tpu.iota {dimensions = array<i32: 1>} : vector<16x16xi32>
    %c1_i32 = arith.constant 1 : i32
    %14 = tpu.dynamic_rotate %6 by %c1_i32 dim 1 : vector<16x16xf32>, i32 -> vector<16x16xf32>
    %c15_i32 = arith.constant 15 : i32
    %15 = tpu.dynamic_rotate %12 by %c15_i32 dim 1 : vector<16x16xf32>, i32 -> vector<16x16xf32>
    %c1_i32_11 = arith.constant 1 : i32
    %16 = vector.broadcast %c1_i32_11 : i32 to vector<16x16xi32>
    %17 = arith.cmpi sge, %13, %16 : vector<16x16xi32>
    %cst_12 = arith.constant 0.000000e+00 : f32
    %18 = vector.broadcast %cst_12 : f32 to vector<16x16xf32>
    %19 = arith.select %17, %14, %18 : vector<16x16xi1>, vector<16x16xf32>
    %20 = arith.addf %19, %9 : vector<16x16xf32>
    %c14_i32 = arith.constant 14 : i32
    %21 = vector.broadcast %c14_i32 : i32 to vector<16x16xi32>
    %22 = arith.cmpi sle, %13, %21 : vector<16x16xi32>
    %cst_13 = arith.constant 0.000000e+00 : f32
    %23 = vector.broadcast %cst_13 : f32 to vector<16x16xf32>
    %24 = arith.select %22, %15, %23 : vector<16x16xi1>, vector<16x16xf32>
    %25 = arith.addf %20, %24 : vector<16x16xf32>
    %c0_14 = arith.constant 0 : index
    %c0_15 = arith.constant 0 : index
    %c0_16 = arith.constant 0 : index
    %26 = vector.load %arg3[%c0_14, %c0_15, %c0_16] : memref<1x16x16xf32, #tpu.memory_space<vmem>>, vector<1x16x16xf32>
    %27 = vector.shape_cast %26 : vector<1x16x16xf32> to vector<16x16xf32>
    %28 = vector.shape_cast %25 : vector<16x16xf32> to vector<1x16x16xf32>
    tpu.vector_store %arg3[%c0_14, %c0_15, %c0_16], %28 {strides = array<i32>} : memref<1x16x16xf32, #tpu.memory_space<vmem>>, vector<1x16x16xf32>,
    %cst_17 = arith.constant dense<0.000000e+00> : vector<16xf32>
    %29 = vector.multi_reduction <add>, %25, %cst_17 [1] : vector<16x16xf32> to vector<16xf32>
    %30 = vector.shape_cast %29 : vector<16xf32> to vector<16x1xf32>
    %c0_18 = arith.constant 0 : index
    %c0_19 = arith.constant 0 : index
    %c0_20 = arith.constant 0 : index
    %31 = vector.load %arg4[%c0_18, %c0_19, %c0_20] : memref<1x16x1xf32, #tpu.memory_space<vmem>>, vector<1x16x1xf32>
    %32 = vector.shape_cast %31 : vector<1x16x1xf32> to vector<16x1xf32>
    %33 = vector.shape_cast %30 : vector<16x1xf32> to vector<1x16x1xf32>
    tpu.vector_store %arg4[%c0_18, %c0_19, %c0_20], %33 {strides = array<i32>} : memref<1x16x1xf32, #tpu.memory_space<vmem>>, vector<1x16x1xf32>,
    %34 = arith.mulf %25, %25 : vector<16x16xf32>
    %cst_21 = arith.constant dense<0.000000e+00> : vector<16xf32>
    %35 = vector.multi_reduction <add>, %34, %cst_21 [1] : vector<16x16xf32> to vector<16xf32>
    %36 = vector.shape_cast %35 : vector<16xf32> to vector<16x1xf32>
    %c0_22 = arith.constant 0 : index
    %c0_23 = arith.constant 0 : index
    %c0_24 = arith.constant 0 : index
    %37 = vector.load %arg5[%c0_22, %c0_23, %c0_24] : memref<1x16x1xf32, #tpu.memory_space<vmem>>, vector<1x16x1xf32>
    %38 = vector.shape_cast %37 : vector<1x16x1xf32> to vector<16x1xf32>
    %39 = vector.shape_cast %36 : vector<16x1xf32> to vector<1x16x1xf32>
    tpu.vector_store %arg5[%c0_22, %c0_23, %c0_24], %39 {strides = array<i32>} : memref<1x16x1xf32, #tpu.memory_space<vmem>>, vector<1x16x1xf32>,
    return
  }
  func.func @transform_0(%arg0: i32) -> (i32, i32, i32) {
    %c0_i32 = arith.constant 0 : i32
    %c0_i32_0 = arith.constant 0 : i32
    %c0_i32_1 = arith.constant 0 : i32
    return %arg0, %c0_i32, %c0_i32_0 : i32, i32, i32
  }
  func.func @transform_1(%arg0: i32) -> (i32, i32, i32) {
    %c0_i32 = arith.constant 0 : i32
    %c0_i32_0 = arith.constant 0 : i32
    %c0_i32_1 = arith.constant 0 : i32
    %c0_i32_2 = arith.constant 0 : i32
    return %c0_i32, %c0_i32_0, %c0_i32_1 : i32, i32, i32
  }
  func.func @transform_2(%arg0: i32) -> (i32, i32, i32) {
    %c0_i32 = arith.constant 0 : i32
    %c0_i32_0 = arith.constant 0 : i32
    %c0_i32_1 = arith.constant 0 : i32
    return %arg0, %c0_i32, %c0_i32_0 : i32, i32, i32
  }
  func.func @transform_3(%arg0: i32) -> (i32, i32, i32) {
    %c0_i32 = arith.constant 0 : i32
    %c0_i32_0 = arith.constant 0 : i32
    %c0_i32_1 = arith.constant 0 : i32
    return %arg0, %c0_i32, %c0_i32_0 : i32, i32, i32
  }
  func.func @transform_4(%arg0: i32) -> (i32, i32, i32) {
    %c0_i32 = arith.constant 0 : i32
    %c0_i32_0 = arith.constant 0 : i32
    %c0_i32_1 = arith.constant 0 : i32
    return %arg0, %c0_i32, %c0_i32_0 : i32, i32, i32
  }
}

module attributes {stable_mosaic.version = 11 : i64} {
  func.func @_bn_act_res_kernel(%arg0: i32, %arg1: memref<1x16x16xf32, #tpu.memory_space<vmem>>, %arg2: memref<1x16x16xf32, #tpu.memory_space<vmem>>, %arg3: memref<16x1xf32, #tpu.memory_space<vmem>>, %arg4: memref<16x1xf32, #tpu.memory_space<vmem>>, %arg5: memref<1x16x16xf32, #tpu.memory_space<vmem>>) attributes {dimension_semantics = [#tpu.dimension_semantics<parallel>], iteration_bounds = array<i64: 2>, scalar_prefetch = 0 : i64, scratch_operands = 0 : i64, tpu.core_type = #tpu.core_type<tc>, window_params = [{transform_indices = @transform_0, window_bounds = array<i64: 1, 16, 16>}, {transform_indices = @transform_1, window_bounds = array<i64: 1, 16, 16>}, {pipeline_mode = #tpu.pipeline_mode<synchronous>, transform_indices = @transform_2, window_bounds = array<i64: 16, 1>}, {pipeline_mode = #tpu.pipeline_mode<synchronous>, transform_indices = @transform_3, window_bounds = array<i64: 16, 1>}, {transform_indices = @transform_4, window_bounds = array<i64: 1, 16, 16>}]} {
    %c0 = arith.constant 0 : index
    %c0_0 = arith.constant 0 : index
    %c0_1 = arith.constant 0 : index
    %0 = vector.load %arg1[%c0, %c0_0, %c0_1] : memref<1x16x16xf32, #tpu.memory_space<vmem>>, vector<1x16x16xf32>
    %1 = vector.shape_cast %0 : vector<1x16x16xf32> to vector<16x16xf32>
    %c0_2 = arith.constant 0 : index
    %c0_3 = arith.constant 0 : index
    %2 = vector.load %arg3[%c0_2, %c0_3] : memref<16x1xf32, #tpu.memory_space<vmem>>, vector<16x1xf32>
    %3 = vector.broadcast %2 : vector<16x1xf32> to vector<16x16xf32>
    %4 = arith.mulf %1, %3 : vector<16x16xf32>
    %c0_4 = arith.constant 0 : index
    %c0_5 = arith.constant 0 : index
    %5 = vector.load %arg4[%c0_4, %c0_5] : memref<16x1xf32, #tpu.memory_space<vmem>>, vector<16x1xf32>
    %6 = vector.broadcast %5 : vector<16x1xf32> to vector<16x16xf32>
    %7 = arith.addf %4, %6 : vector<16x16xf32>
    %cst = arith.constant 0.000000e+00 : f32
    %8 = vector.broadcast %cst : f32 to vector<16x16xf32>
    %9 = arith.maximumf %7, %8 : vector<16x16xf32>
    %c0_6 = arith.constant 0 : index
    %c0_7 = arith.constant 0 : index
    %c0_8 = arith.constant 0 : index
    %10 = vector.load %arg2[%c0_6, %c0_7, %c0_8] : memref<1x16x16xf32, #tpu.memory_space<vmem>>, vector<1x16x16xf32>
    %11 = vector.shape_cast %10 : vector<1x16x16xf32> to vector<16x16xf32>
    %12 = arith.addf %9, %11 : vector<16x16xf32>
    %c0_9 = arith.constant 0 : index
    %c0_10 = arith.constant 0 : index
    %c0_11 = arith.constant 0 : index
    %13 = vector.load %arg5[%c0_9, %c0_10, %c0_11] : memref<1x16x16xf32, #tpu.memory_space<vmem>>, vector<1x16x16xf32>
    %14 = vector.shape_cast %13 : vector<1x16x16xf32> to vector<16x16xf32>
    %15 = vector.shape_cast %12 : vector<16x16xf32> to vector<1x16x16xf32>
    tpu.vector_store %arg5[%c0_9, %c0_10, %c0_11], %15 {strides = array<i32>} : memref<1x16x16xf32, #tpu.memory_space<vmem>>, vector<1x16x16xf32>,
    return
  }
  func.func @transform_0(%arg0: i32) -> (i32, i32, i32) {
    %c0_i32 = arith.constant 0 : i32
    %c0_i32_0 = arith.constant 0 : i32
    %c0_i32_1 = arith.constant 0 : i32
    return %arg0, %c0_i32, %c0_i32_0 : i32, i32, i32
  }
  func.func @transform_1(%arg0: i32) -> (i32, i32, i32) {
    %c0_i32 = arith.constant 0 : i32
    %c0_i32_0 = arith.constant 0 : i32
    %c0_i32_1 = arith.constant 0 : i32
    return %arg0, %c0_i32, %c0_i32_0 : i32, i32, i32
  }
  func.func @transform_2(%arg0: i32) -> (i32, i32) {
    %c0_i32 = arith.constant 0 : i32
    %c0_i32_0 = arith.constant 0 : i32
    %c0_i32_1 = arith.constant 0 : i32
    return %c0_i32, %c0_i32_0 : i32, i32
  }
  func.func @transform_3(%arg0: i32) -> (i32, i32) {
    %c0_i32 = arith.constant 0 : i32
    %c0_i32_0 = arith.constant 0 : i32
    %c0_i32_1 = arith.constant 0 : i32
    return %c0_i32, %c0_i32_0 : i32, i32
  }
  func.func @transform_4(%arg0: i32) -> (i32, i32, i32) {
    %c0_i32 = arith.constant 0 : i32
    %c0_i32_0 = arith.constant 0 : i32
    %c0_i32_1 = arith.constant 0 : i32
    return %arg0, %c0_i32, %c0_i32_0 : i32, i32, i32
  }
}

</mosaic_0001>

<llo_original>
// kernel: cnn_layer_forward.3
$region0: #{cnn_layer_forward.3}
  #allocation0 [shape = 'u32[]', space=smem, size = 0x4, offset = 0x4, fixed_abs, tag = 'smem constant byte address 0x4 - core index']
  #allocation1 [shape = 'u32[144,128]{1,0:T(1,128)}', space=vmem, size = 0x12000, scoped, tag = 'internal scratch']
  %s0 = inlined_call_operand.vmem [shape: f32[2,16,16], index: 0, kind: input, shape index: {}]
  %s1 = inlined_call_operand.vmem [shape: f32[2,16,16], index: 1, kind: input, shape index: {}]
  %s2 = inlined_call_operand.vmem [shape: f32[16,1], index: 2, kind: input, shape index: {}]
  %s3 = inlined_call_operand.vmem [shape: f32[16,1], index: 3, kind: input, shape index: {}]
  %s4 = inlined_call_operand.hbm [shape: f32[2,16,16], index: 4, kind: output, shape index: {}]
  %s5 = sld [smem:[#allocation0]]
  $region49: #{cnn_layer_forward.3} parent=0
    _
  %s7 = ssub.s32 1, %s5
  %s8 = scalar_select 0, %s7, %s5
  $region1: #{cnn_layer_forward.3} parent=0
    #allocation2 [shape = 'u8[16384]{0}', space=vmem, size = 0x4000, scoped, tag = 'output window, operand 0']
    #allocation3 [shape = 's32[2]{0}', space=sflag, size = 0x8, scoped, tag = 'scoped memory for cnn_layer_forward.3']
    %9 = vsyncpa [#allocation3], 0
    %s10 = scalar_lea.sflag [#allocation3], 1
    %11 = vsyncpa %s10, 0
    loop: start=0, step=1, limit=4
    $region2: #{cnn_layer_forward.3} parent=1 // loop_pre_header
      _
    $region3: #{cnn_layer_forward.3} parent=1 // loop_header
      %s13 = sphi 0, %s17
      %p14 = scmp.ge.s32.totalorder %s13, 4
      %s23 = sphi 0, %s25
      %s26 = sphi 0, %s23
      %s27 = sphi 0, %s26
      %s43 = sphi 0, %s27
      %s49 = sphi 0, %s51
      %s52 = sphi 0, %s49
      %s53 = sphi 0, %s52
      %s69 = sphi 0, %s53
      %s73 = sphi 0, %s73
      %s75 = sphi 0, %s73
      %s76 = sphi 0, %s75
      %s90 = sphi 0, %s76
      %s94 = sphi 0, %s94
      %s96 = sphi 0, %s94
      %s97 = sphi 0, %s96
      %s111 = sphi 0, %s97
      %s117 = sphi 0, %s119
      %s120 = sphi 0, %s117
      %s121 = sphi 0, %s120
      %s137 = sphi 0, %s121
    $region4: #{cnn_layer_forward.3} parent=1 // loop_header_branch
      %16 = sbr.rel (%p14) target = $region8
    $region5: #{cnn_layer_forward.3} parent=1 // loop_body
      %s18 = ssub.s32 %s13, 1
      %s19 = ssub.s32 %s13, 2
      %s20 = sadd.s32 %s13, 1
      %s21 = ssub.s32 %s13, %s20
      %p22 = scmp.eq.s32.totalorder %s21, 0
      %s24 = sadd.s32 %s23, 1
      %s25 = scalar_select %p22, %s23, %s24
      %p28 = pneg %p22
      %p29 = scmp.eq.s32.totalorder %s13, 1
      %p30 = por %p28, %p29
      %p31 = scmp.ne.s32.totalorder %s23, %s26
      %p32 = scmp.eq.s32.totalorder %s13, 0
      %p33 = por %p31, %p32
      %p34 = scmp.ne.s32.totalorder %s23, %s26
      %p35 = scmp.eq.s32.totalorder %s18, 1
      %p36 = por %p34, %p35
      %p37 = scmp.ne.s32.totalorder %s26, %s27
      %p38 = scmp.eq.s32.totalorder %s18, 0
      %p39 = por %p37, %p38
      %p40 = scmp.ne.s32.totalorder %s26, %s27
      %p41 = scmp.eq.s32.totalorder %s19, 1
      %p42 = por %p40, %p41
      %p44 = scmp.ne.s32.totalorder %s27, %s43
      %p45 = scmp.eq.s32.totalorder %s19, 0
      %p46 = por %p44, %p45
      %s47 = ssub.s32 %s13, %s20
      %p48 = scmp.eq.s32.totalorder %s47, 0
      %s50 = sadd.s32 %s49, 1
      %s51 = scalar_select %p48, %s49, %s50
      %p54 = pneg %p48
      %p55 = scmp.eq.s32.totalorder %s13, 1
      %p56 = por %p54, %p55
      %p57 = scmp.ne.s32.totalorder %s49, %s52
      %p58 = scmp.eq.s32.totalorder %s13, 0
      %p59 = por %p57, %p58
      %p60 = scmp.ne.s32.totalorder %s49, %s52
      %p61 = scmp.eq.s32.totalorder %s18, 1
      %p62 = por %p60, %p61
      %p63 = scmp.ne.s32.totalorder %s52, %s53
      %p64 = scmp.eq.s32.totalorder %s18, 0
      %p65 = por %p63, %p64
      %p66 = scmp.ne.s32.totalorder %s52, %s53
      %p67 = scmp.eq.s32.totalorder %s19, 1
      %p68 = por %p66, %p67
      %p70 = scmp.ne.s32.totalorder %s53, %s69
      %p71 = scmp.eq.s32.totalorder %s19, 0
      %p72 = por %p70, %p71
      %s74 = sadd.s32 %s73, 1
      %p77 = scmp.eq.s32.totalorder %s13, 1
      %p78 = scmp.ne.s32.totalorder %s73, %s75
      %p79 = scmp.eq.s32.totalorder %s13, 0
      %p80 = por %p78, %p79
      %p81 = scmp.ne.s32.totalorder %s73, %s75
      %p82 = scmp.eq.s32.totalorder %s18, 1
      %p83 = por %p81, %p82
      %p84 = scmp.ne.s32.totalorder %s75, %s76
      %p85 = scmp.eq.s32.totalorder %s18, 0
      %p86 = por %p84, %p85
      %p87 = scmp.ne.s32.totalorder %s75, %s76
      %p88 = scmp.eq.s32.totalorder %s19, 1
      %p89 = por %p87, %p88
      %p91 = scmp.ne.s32.totalorder %s76, %s90
      %p92 = scmp.eq.s32.totalorder %s19, 0
      %p93 = por %p91, %p92
      %s95 = sadd.s32 %s94, 1
      %p98 = scmp.eq.s32.totalorder %s13, 1
      %p99 = scmp.ne.s32.totalorder %s94, %s96
      %p100 = scmp.eq.s32.totalorder %s13, 0
      %p101 = por %p99, %p100
      %p102 = scmp.ne.s32.totalorder %s94, %s96
      %p103 = scmp.eq.s32.totalorder %s18, 1
      %p104 = por %p102, %p103
      %p105 = scmp.ne.s32.totalorder %s96, %s97
      %p106 = scmp.eq.s32.totalorder %s18, 0
      %p107 = por %p105, %p106
      %p108 = scmp.ne.s32.totalorder %s96, %s97
      %p109 = scmp.eq.s32.totalorder %s19, 1
      %p110 = por %p108, %p109
      %p112 = scmp.ne.s32.totalorder %s97, %s111
      %p113 = scmp.eq.s32.totalorder %s19, 0
      %p114 = por %p112, %p113
      %s115 = ssub.s32 %s13, %s20
      %p116 = scmp.eq.s32.totalorder %s115, 0
      %s118 = sadd.s32 %s117, 1
      %s119 = scalar_select %p116, %s117, %s118
      %p122 = pneg %p116
      %p123 = scmp.eq.s32.totalorder %s13, 1
      %p124 = por %p122, %p123
      %p125 = scmp.ne.s32.totalorder %s117, %s120
      %p126 = scmp.eq.s32.totalorder %s13, 0
      %p127 = por %p125, %p126
      %p128 = scmp.ne.s32.totalorder %s117, %s120
      %p129 = scmp.eq.s32.totalorder %s18, 1
      %p130 = por %p128, %p129
      %p131 = scmp.ne.s32.totalorder %s120, %s121
      %p132 = scmp.eq.s32.totalorder %s18, 0
      %p133 = por %p131, %p132
      %p134 = scmp.ne.s32.totalorder %s120, %s121
      %p135 = scmp.eq.s32.totalorder %s19, 1
      %p136 = por %p134, %p135
      %p138 = scmp.ne.s32.totalorder %s121, %s137
      %p139 = scmp.eq.s32.totalorder %s19, 0
      %p140 = por %p138, %p139
      %p141 = scmp.le.s32.totalorder 1, %s13
      %p142 = scmp.lt.s32.totalorder %s13, 3
      %p143 = pnand %p141, %p142
      %p144 = pneg %p143
      // Predicated region
      $region9: #{cnn_layer_forward.3} parent=5 // pred_check
        _
      $region10: #{cnn_layer_forward.3} parent=5 // pred_check_branch
        %146 = sbr.rel (%p143) target = $region12
      $region11: #{cnn_layer_forward.3} parent=5 // pred_region
        %s147 = ssub.s32 %s13, 1
        // Predicated region
        $region13: #{cnn_layer_forward.3} parent=11 // pred_check
          %p148 = pneg %p86
        $region14: #{cnn_layer_forward.3} parent=11 // pred_check_branch
          %150 = sbr.rel (%p148) target = $region16
        $region15: #{cnn_layer_forward.3} parent=11 // pred_region
          _
        $region16: #{cnn_layer_forward.3} parent=11 // pred_fallthru
          _
        // Predicated region
        $region17: #{cnn_layer_forward.3} parent=11 // pred_check
          %p151 = pneg %p107
        $region18: #{cnn_layer_forward.3} parent=11 // pred_check_branch
          %153 = sbr.rel (%p151) target = $region20
        $region19: #{cnn_layer_forward.3} parent=11 // pred_region
          _
        $region20: #{cnn_layer_forward.3} parent=11 // pred_fallthru
          _
      $region12: #{cnn_layer_forward.3} parent=5 // pred_fallthru
        _
      %p154 = scmp.lt.s32.totalorder %s13, 2
      // Predicated region
      $region21: #{cnn_layer_forward.3} parent=5 // pred_check
        %p155 = pneg %p154
      $region22: #{cnn_layer_forward.3} parent=5 // pred_check_branch
        %157 = sbr.rel (%p155) target = $region24
      $region23: #{cnn_layer_forward.3} parent=5 // pred_region
        // Predicated region
        $region25: #{cnn_layer_forward.3} parent=23 // pred_check
          %p158 = pneg %p33
        $region26: #{cnn_layer_forward.3} parent=23 // pred_check_branch
          %160 = sbr.rel (%p158) target = $region28
        $region27: #{cnn_layer_forward.3} parent=23 // pred_region
          %p161 = scmp.lt.s32.totalorder %s13, 1
          %s162 = scalar_select %p161, %s13, 1
          %s163 = smul.addr %s162, 2
          %s164 = smul.addr %s163, 8
          %s165 = scalar_lea.vmem %s0, %s164
        $region28: #{cnn_layer_forward.3} parent=23 // pred_fallthru
          _
        // Predicated region
        $region29: #{cnn_layer_forward.3} parent=23 // pred_check
          %p166 = pneg %p59
        $region30: #{cnn_layer_forward.3} parent=23 // pred_check_branch
          %168 = sbr.rel (%p166) target = $region32
        $region31: #{cnn_layer_forward.3} parent=23 // pred_region
          %p169 = scmp.lt.s32.totalorder %s13, 1
          %s170 = scalar_select %p169, %s13, 1
          %s171 = smul.addr %s170, 2
          %s172 = smul.addr %s171, 8
          %s173 = scalar_lea.vmem %s1, %s172
        $region32: #{cnn_layer_forward.3} parent=23 // pred_fallthru
          _
      $region24: #{cnn_layer_forward.3} parent=5 // pred_fallthru
        _
      %p174 = scmp.le.s32.totalorder 1, %s13
      %p175 = scmp.lt.s32.totalorder %s13, 3
      %p176 = pnand %p174, %p175
      %p177 = pneg %p176
      // Predicated region
      $region33: #{cnn_layer_forward.3} parent=5 // pred_check
        _
      $region34: #{cnn_layer_forward.3} parent=5 // pred_check_branch
        %179 = sbr.rel (%p176) target = $region36
      $region35: #{cnn_layer_forward.3} parent=5 // pred_region
        %s180 = ssub.s32 %s13, 1
        %p181 = scmp.lt.s32.totalorder %s18, 1
        %s182 = scalar_select %p181, %s18, 1
        %s183 = smul.addr %s182, 2
        %s184 = smul.addr %s183, 8
        %s185 = scalar_lea.vmem %s0, %s184
        %p186 = pneg %p39
        %p187 = pneg %p36
        %p188 = scmp.lt.s32.totalorder %s18, 1
        %s189 = scalar_select %p188, %s18, 1
        %s190 = smul.addr %s189, 2
        %s191 = smul.addr %s190, 8
        %s192 = scalar_lea.vmem %s1, %s191
        %p193 = pneg %p65
        %p194 = pneg %p62
        %p195 = pneg %p86
        %p196 = pneg %p83
        %p197 = pneg %p107
        %p198 = pneg %p104
        %p199 = pneg %p133
        %p200 = pneg %p130
        %s201 = sand.u32 %s120, 1
        %s202 = scalar_lea.sflag [#allocation3], %s201
        %s203 = sand.u32 %s120, 1
        %s204 = smul.addr %s203, 16
        %s205 = scalar_lea.vmem [#allocation2], %s204
        %p206 = scmp.lt.s32.totalorder %s18, 1
        %s207 = scalar_select %p206, %s18, 1
        %s208 = smul.addr %s207, 2
        %s209 = smul.addr %s208, 8
        %s210 = scalar_lea.vmem %s0, %s209
        %p211 = scmp.lt.s32.totalorder %s18, 1
        %s212 = scalar_select %p211, %s18, 1
        %s213 = smul.addr %s212, 2
        %s214 = smul.addr %s213, 8
        %s215 = scalar_lea.vmem %s1, %s214
        %v216 = vld [vmem:[%s210] sm:$0xff]
        %v217 = vld [vmem:[%s210 + $0x8] sm:$0xff]
        %v218 = vld [vmem:[%s2] sm:$0xff]
        %v219 = vld [vmem:[%s2 + $0x8] sm:$0xff]
        %221 = vset.pattern.permute.xlu0 0
        %222 = vperm.xlu0 %221, %v218
        %v223 = vpop.permute.xlu0 %222
        %226 = vset.pattern.permute.xlu0 0
        %227 = vperm.xlu0 %226, %v219
        %v228 = vpop.permute.xlu0 %227
        %v230 = vmul.f32 %v216, %v223
        %v231 = vmul.f32 %v217, %v228
        %v232 = vld [vmem:[%s3] sm:$0xff]
        %v233 = vld [vmem:[%s3 + $0x8] sm:$0xff]
        %235 = vset.pattern.permute.xlu0 0
        %236 = vperm.xlu0 %235, %v232
        %v237 = vpop.permute.xlu0 %236
        %240 = vset.pattern.permute.xlu0 0
        %241 = vperm.xlu0 %240, %v233
        %v242 = vpop.permute.xlu0 %241
        %v244 = vadd.f32 %v230, %v237
        %v245 = vadd.f32 %v231, %v242
        %v246 = vmax.f32 %v244, 0.0
        %v247 = vmax.f32 %v245, 0.0
        %v248 = vld [vmem:[%s215] sm:$0xff]
        %v249 = vld [vmem:[%s215 + $0x8] sm:$0xff]
        %v250 = vadd.f32 %v246, %v248
        %v251 = vadd.f32 %v247, %v249
        %vm252 = vcmask 130048
        %253 = vst.msk [vmem:[%s205] sm:$0xff] %vm252, %v250
        %254 = vst.msk [vmem:[%s205 + $0x8] sm:$0xff] %vm252, %v251
        %s255 = sand.u32 %s120, 1
        %s256 = scalar_lea.sflag [#allocation3], %s255
        %s257 = sand.u32 %s120, 1
        %s258 = smul.addr %s257, 16
        %s259 = scalar_lea.vmem [#allocation2], %s258
        // Predicated region
        $region37: #{cnn_layer_forward.3} parent=35 // pred_check
          %p260 = pneg %p130
        $region38: #{cnn_layer_forward.3} parent=35 // pred_check_branch
          %262 = sbr.rel (%p260) target = $region40
        $region39: #{cnn_layer_forward.3} parent=35 // pred_region
          %s264 = ssub.s32 256, 256
          %265 = vsyncadd %s256, %s264
          %s266 = smul.addr %s18, 2
          %s267 = smul.addr %s266, 128
          %s268 = scalar_lea.hbm %s4, %s267
          %s269 = sshll.u32 %s259, 4
          %s270 = int_to_ptr.vmem [resolvable:$true] %s269
          %275 = dma.vmem_to_hbm [thread:$0]  %s270, 256, %s268, %s256, 128, 128, 8
        $region40: #{cnn_layer_forward.3} parent=35 // pred_fallthru
          _
      $region36: #{cnn_layer_forward.3} parent=5 // pred_fallthru
        _
      %p276 = scmp.le.s32.totalorder 2, %s13
      // Predicated region
      $region41: #{cnn_layer_forward.3} parent=5 // pred_check
        %p277 = pneg %p276
      $region42: #{cnn_layer_forward.3} parent=5 // pred_check_branch
        %279 = sbr.rel (%p277) target = $region44
      $region43: #{cnn_layer_forward.3} parent=5 // pred_region
        %s280 = ssub.s32 %s13, 2
        // Predicated region
        $region45: #{cnn_layer_forward.3} parent=43 // pred_check
          %p281 = pneg %p136
        $region46: #{cnn_layer_forward.3} parent=43 // pred_check_branch
          %283 = sbr.rel (%p281) target = $region48
        $region47: #{cnn_layer_forward.3} parent=43 // pred_region
          %s284 = sand.u32 %s121, 1
          %s285 = scalar_lea.sflag [#allocation3], %s284
          %s286 = sand.u32 %s121, 1
          %s287 = smul.addr %s286, 16
          %s288 = scalar_lea.vmem [#allocation2], %s287
          %289 = dma.done %s285, 256
        $region48: #{cnn_layer_forward.3} parent=43 // pred_fallthru
          _
      $region44: #{cnn_layer_forward.3} parent=5 // pred_fallthru
        _
    $region6: #{cnn_layer_forward.3} parent=1 // loop_footer
      %s17 = sadd.s32 1, %s13
    $region7: #{cnn_layer_forward.3} parent=1 // loop_footer_branch
      %12 = sbr.rel target = $region3
    $region8: #{cnn_layer_forward.3} parent=1 // loop_exit
      _
    %290 = vsyncpa [#allocation3], 1
    %s291 = scalar_lea.sflag [#allocation3], 1
    %292 = vsyncpa %s291, 1

// kernel: cnn_layer_forward.2
$region0: #{cnn_layer_forward.2}
  #allocation0 [shape = 'u32[]', space=smem, size = 0x4, offset = 0x4, fixed_abs, tag = 'smem constant byte address 0x4 - core index']
  #allocation1 [shape = 'u32[144,128]{1,0:T(1,128)}', space=vmem, size = 0x12000, scoped, tag = 'internal scratch']
  %s0 = inlined_call_operand.vmem [shape: f32[2,16,16], index: 0, kind: input, shape index: {}]
  %s1 = inlined_call_operand.vmem [shape: bf16[3,16,16], index: 1, kind: input, shape index: {}]
  %s2 = inlined_call_operand.vmem [shape: f32[2,16,16], index: 2, kind: output, shape index: {0}]
  %s3 = inlined_call_operand.vmem [shape: f32[2,16,1], index: 3, kind: output, shape index: {1}]
  %s4 = inlined_call_operand.vmem [shape: f32[2,16,1], index: 4, kind: output, shape index: {2}]
  %5 = xla_tuple %s2, %s3, %s4
  %s6 = sld [smem:[#allocation0]]
  $region57: #{cnn_layer_forward.2} parent=0
    _
  %s8 = ssub.s32 1, %s6
  %s9 = scalar_select 0, %s8, %s6
  loop: start=0, step=1, limit=4
  $region2: #{cnn_layer_forward.2} parent=0 // loop_pre_header
    _
  $region3: #{cnn_layer_forward.2} parent=0 // loop_header
    %s11 = sphi 0, %s15
    %p12 = scmp.ge.s32.totalorder %s11, 4
    %s21 = sphi 0, %s23
    %s24 = sphi 0, %s21
    %s25 = sphi 0, %s24
    %s41 = sphi 0, %s25
    %s45 = sphi 0, %s45
    %s47 = sphi 0, %s45
    %s48 = sphi 0, %s47
    %s62 = sphi 0, %s48
    %s68 = sphi 0, %s70
    %s71 = sphi 0, %s68
    %s72 = sphi 0, %s71
    %s88 = sphi 0, %s72
    %s94 = sphi 0, %s96
    %s97 = sphi 0, %s94
    %s98 = sphi 0, %s97
    %s114 = sphi 0, %s98
    %s120 = sphi 0, %s122
    %s123 = sphi 0, %s120
    %s124 = sphi 0, %s123
    %s140 = sphi 0, %s124
  $region4: #{cnn_layer_forward.2} parent=0 // loop_header_branch
    %14 = sbr.rel (%p12) target = $region8
  $region5: #{cnn_layer_forward.2} parent=0 // loop_body
    %s16 = ssub.s32 %s11, 1
    %s17 = ssub.s32 %s11, 2
    %s18 = sadd.s32 %s11, 1
    %s19 = ssub.s32 %s11, %s18
    %p20 = scmp.eq.s32.totalorder %s19, 0
    %s22 = sadd.s32 %s21, 1
    %s23 = scalar_select %p20, %s21, %s22
    %p26 = pneg %p20
    %p27 = scmp.eq.s32.totalorder %s11, 1
    %p28 = por %p26, %p27
    %p29 = scmp.ne.s32.totalorder %s21, %s24
    %p30 = scmp.eq.s32.totalorder %s11, 0
    %p31 = por %p29, %p30
    %p32 = scmp.ne.s32.totalorder %s21, %s24
    %p33 = scmp.eq.s32.totalorder %s16, 1
    %p34 = por %p32, %p33
    %p35 = scmp.ne.s32.totalorder %s24, %s25
    %p36 = scmp.eq.s32.totalorder %s16, 0
    %p37 = por %p35, %p36
    %p38 = scmp.ne.s32.totalorder %s24, %s25
    %p39 = scmp.eq.s32.totalorder %s17, 1
    %p40 = por %p38, %p39
    %p42 = scmp.ne.s32.totalorder %s25, %s41
    %p43 = scmp.eq.s32.totalorder %s17, 0
    %p44 = por %p42, %p43
    %s46 = sadd.s32 %s45, 1
    %p49 = scmp.eq.s32.totalorder %s11, 1
    %p50 = scmp.ne.s32.totalorder %s45, %s47
    %p51 = scmp.eq.s32.totalorder %s11, 0
    %p52 = por %p50, %p51
    %p53 = scmp.ne.s32.totalorder %s45, %s47
    %p54 = scmp.eq.s32.totalorder %s16, 1
    %p55 = por %p53, %p54
    %p56 = scmp.ne.s32.totalorder %s47, %s48
    %p57 = scmp.eq.s32.totalorder %s16, 0
    %p58 = por %p56, %p57
    %p59 = scmp.ne.s32.totalorder %s47, %s48
    %p60 = scmp.eq.s32.totalorder %s17, 1
    %p61 = por %p59, %p60
    %p63 = scmp.ne.s32.totalorder %s48, %s62
    %p64 = scmp.eq.s32.totalorder %s17, 0
    %p65 = por %p63, %p64
    %s66 = ssub.s32 %s11, %s18
    %p67 = scmp.eq.s32.totalorder %s66, 0
    %s69 = sadd.s32 %s68, 1
    %s70 = scalar_select %p67, %s68, %s69
    %p73 = pneg %p67
    %p74 = scmp.eq.s32.totalorder %s11, 1
    %p75 = por %p73, %p74
    %p76 = scmp.ne.s32.totalorder %s68, %s71
    %p77 = scmp.eq.s32.totalorder %s11, 0
    %p78 = por %p76, %p77
    %p79 = scmp.ne.s32.totalorder %s68, %s71
    %p80 = scmp.eq.s32.totalorder %s16, 1
    %p81 = por %p79, %p80
    %p82 = scmp.ne.s32.totalorder %s71, %s72
    %p83 = scmp.eq.s32.totalorder %s16, 0
    %p84 = por %p82, %p83
    %p85 = scmp.ne.s32.totalorder %s71, %s72
    %p86 = scmp.eq.s32.totalorder %s17, 1
    %p87 = por %p85, %p86
    %p89 = scmp.ne.s32.totalorder %s72, %s88
    %p90 = scmp.eq.s32.totalorder %s17, 0
    %p91 = por %p89, %p90
    %s92 = ssub.s32 %s11, %s18
    %p93 = scmp.eq.s32.totalorder %s92, 0
    %s95 = sadd.s32 %s94, 1
    %s96 = scalar_select %p93, %s94, %s95
    %p99 = pneg %p93
    %p100 = scmp.eq.s32.totalorder %s11, 1
    %p101 = por %p99, %p100
    %p102 = scmp.ne.s32.totalorder %s94, %s97
    %p103 = scmp.eq.s32.totalorder %s11, 0
    %p104 = por %p102, %p103
    %p105 = scmp.ne.s32.totalorder %s94, %s97
    %p106 = scmp.eq.s32.totalorder %s16, 1
    %p107 = por %p105, %p106
    %p108 = scmp.ne.s32.totalorder %s97, %s98
    %p109 = scmp.eq.s32.totalorder %s16, 0
    %p110 = por %p108, %p109
    %p111 = scmp.ne.s32.totalorder %s97, %s98
    %p112 = scmp.eq.s32.totalorder %s17, 1
    %p113 = por %p111, %p112
    %p115 = scmp.ne.s32.totalorder %s98, %s114
    %p116 = scmp.eq.s32.totalorder %s17, 0
    %p117 = por %p115, %p116
    %s118 = ssub.s32 %s11, %s18
    %p119 = scmp.eq.s32.totalorder %s118, 0
    %s121 = sadd.s32 %s120, 1
    %s122 = scalar_select %p119, %s120, %s121
    %p125 = pneg %p119
    %p126 = scmp.eq.s32.totalorder %s11, 1
    %p127 = por %p125, %p126
    %p128 = scmp.ne.s32.totalorder %s120, %s123
    %p129 = scmp.eq.s32.totalorder %s11, 0
    %p130 = por %p128, %p129
    %p131 = scmp.ne.s32.totalorder %s120, %s123
    %p132 = scmp.eq.s32.totalorder %s16, 1
    %p133 = por %p131, %p132
    %p134 = scmp.ne.s32.totalorder %s123, %s124
    %p135 = scmp.eq.s32.totalorder %s16, 0
    %p136 = por %p134, %p135
    %p137 = scmp.ne.s32.totalorder %s123, %s124
    %p138 = scmp.eq.s32.totalorder %s17, 1
    %p139 = por %p137, %p138
    %p141 = scmp.ne.s32.totalorder %s124, %s140
    %p142 = scmp.eq.s32.totalorder %s17, 0
    %p143 = por %p141, %p142
    %p144 = scmp.le.s32.totalorder 1, %s11
    %p145 = scmp.lt.s32.totalorder %s11, 3
    %p146 = pnand %p144, %p145
    %p147 = pneg %p146
    // Predicated region
    $region9: #{cnn_layer_forward.2} parent=5 // pred_check
      _
    $region10: #{cnn_layer_forward.2} parent=5 // pred_check_branch
      %149 = sbr.rel (%p146) target = $region12
    $region11: #{cnn_layer_forward.2} parent=5 // pred_region
      %s150 = ssub.s32 %s11, 1
      // Predicated region
      $region13: #{cnn_layer_forward.2} parent=11 // pred_check
        %p151 = pneg %p58
      $region14: #{cnn_layer_forward.2} parent=11 // pred_check_branch
        %153 = sbr.rel (%p151) target = $region16
      $region15: #{cnn_layer_forward.2} parent=11 // pred_region
        _
      $region16: #{cnn_layer_forward.2} parent=11 // pred_fallthru
        _
    $region12: #{cnn_layer_forward.2} parent=5 // pred_fallthru
      _
    %p154 = scmp.lt.s32.totalorder %s11, 2
    // Predicated region
    $region17: #{cnn_layer_forward.2} parent=5 // pred_check
      %p155 = pneg %p154
    $region18: #{cnn_layer_forward.2} parent=5 // pred_check_branch
      %157 = sbr.rel (%p155) target = $region20
    $region19: #{cnn_layer_forward.2} parent=5 // pred_region
      // Predicated region
      $region21: #{cnn_layer_forward.2} parent=19 // pred_check
        %p158 = pneg %p31
      $region22: #{cnn_layer_forward.2} parent=19 // pred_check_branch
        %160 = sbr.rel (%p158) target = $region24
      $region23: #{cnn_layer_forward.2} parent=19 // pred_region
        %p161 = scmp.lt.s32.totalorder %s11, 1
        %s162 = scalar_select %p161, %s11, 1
        %s163 = smul.addr %s162, 2
        %s164 = smul.addr %s163, 8
        %s165 = scalar_lea.vmem %s0, %s164
      $region24: #{cnn_layer_forward.2} parent=19 // pred_fallthru
        _
    $region20: #{cnn_layer_forward.2} parent=5 // pred_fallthru
      _
    %p166 = scmp.le.s32.totalorder 1, %s11
    %p167 = scmp.lt.s32.totalorder %s11, 3
    %p168 = pnand %p166, %p167
    %p169 = pneg %p168
    // Predicated region
    $region25: #{cnn_layer_forward.2} parent=5 // pred_check
      _
    $region26: #{cnn_layer_forward.2} parent=5 // pred_check_branch
      %171 = sbr.rel (%p168) target = $region28
    $region27: #{cnn_layer_forward.2} parent=5 // pred_region
      %s172 = ssub.s32 %s11, 1
      %p173 = scmp.lt.s32.totalorder %s16, 1
      %s174 = scalar_select %p173, %s16, 1
      %s175 = smul.addr %s174, 2
      %s176 = smul.addr %s175, 8
      %s177 = scalar_lea.vmem %s0, %s176
      %p178 = pneg %p37
      %p179 = pneg %p34
      %p180 = pneg %p58
      %p181 = pneg %p55
      %p182 = pneg %p84
      %p183 = pneg %p81
      %p184 = scmp.lt.s32.totalorder %s16, 1
      %s185 = scalar_select %p184, %s16, 1
      %s186 = smul.addr %s185, 2
      %s187 = smul.addr %s186, 8
      %s188 = scalar_lea.vmem %s2, %s187
      %p189 = pneg %p110
      %p190 = pneg %p107
      %p191 = scmp.lt.s32.totalorder %s16, 1
      %s192 = scalar_select %p191, %s16, 1
      %s193 = smul.addr %s192, 2
      %s194 = smul.addr %s193, 8
      %s195 = scalar_lea.vmem %s3, %s194
      %p196 = pneg %p136
      %p197 = pneg %p133
      %p198 = scmp.lt.s32.totalorder %s16, 1
      %s199 = scalar_select %p198, %s16, 1
      %s200 = smul.addr %s199, 2
      %s201 = smul.addr %s200, 8
      %s202 = scalar_lea.vmem %s4, %s201
      %p203 = scmp.lt.s32.totalorder %s16, 1
      %s204 = scalar_select %p203, %s16, 1
      %s205 = smul.addr %s204, 2
      %s206 = smul.addr %s205, 8
      %s207 = scalar_lea.vmem %s0, %s206
      %p208 = scmp.lt.s32.totalorder %s16, 1
      %s209 = scalar_select %p208, %s16, 1
      %s210 = smul.addr %s209, 2
      %s211 = smul.addr %s210, 8
      %s212 = scalar_lea.vmem %s2, %s211
      %p213 = scmp.lt.s32.totalorder %s16, 1
      %s214 = scalar_select %p213, %s16, 1
      %s215 = smul.addr %s214, 2
      %s216 = smul.addr %s215, 8
      %s217 = scalar_lea.vmem %s3, %s216
      %p218 = scmp.lt.s32.totalorder %s16, 1
      %s219 = scalar_select %p218, %s16, 1
      %s220 = smul.addr %s219, 2
      %s221 = smul.addr %s220, 8
      %s222 = scalar_lea.vmem %s4, %s221
      %v224 = vld [vmem:[%s207] sm:$0xff]
      %v225 = vld [vmem:[%s207 + $0x8] sm:$0xff]
      %226 = vxpose.xlu0.b32.start [1/16] %v224, 128
      %227 = vxpose.xlu0.b32.cont [2/16] %v225, 128
      %228 = vxpose.xlu0.b32.cont [3/16] 0.0, 128
      %229 = vxpose.xlu0.b32.cont [4/16] 0.0, 128
      %230 = vxpose.xlu0.b32.cont [5/16] 0.0, 128
      %231 = vxpose.xlu0.b32.cont [6/16] 0.0, 128
      %232 = vxpose.xlu0.b32.cont [7/16] 0.0, 128
      %233 = vxpose.xlu0.b32.cont [8/16] 0.0, 128
      %234 = vxpose.xlu0.b32.cont [9/16] 0.0, 128
      %235 = vxpose.xlu0.b32.cont [10/16] 0.0, 128
      %236 = vxpose.xlu0.b32.cont [11/16] 0.0, 128
      %237 = vxpose.xlu0.b32.cont [12/16] 0.0, 128
      %238 = vxpose.xlu0.b32.cont [13/16] 0.0, 128
      %239 = vxpose.xlu0.b32.cont [14/16] 0.0, 128
      %240 = vxpose.xlu0.b32.cont [15/16] 0.0, 128
      %241 = vxpose.xlu0.b32.end [16/16] 0.0, 128
      %v242 = vpop.trf.xlu0
      %v243 = vpop.trf.xlu0
      %v244 = vpop.trf.xlu0
      %v245 = vpop.trf.xlu0
      %v246 = vpop.trf.xlu0
      %v247 = vpop.trf.xlu0
      %v248 = vpop.trf.xlu0
      %v249 = vpop.trf.xlu0
      %v250 = vpop.trf.xlu0
      %v251 = vpop.trf.xlu0
      %v252 = vpop.trf.xlu0
      %v253 = vpop.trf.xlu0
      %v254 = vpop.trf.xlu0
      %v255 = vpop.trf.xlu0
      %v256 = vpop.trf.xlu0
      %v257 = vpop.trf.xlu0
      %v258 = vpack.c.bf16 %v243, %v242
      %v259 = vld [vmem:[%s1] sm:$0xf]
      %v260 = vld [vmem:[%s1 + $0x4] sm:$0xf]
      %v263 = vunpack.c.l.b16 %v259
      %v264 = vunpack.c.l.b16 %v260
      %v265 = vpack.c.b16 %v264, %v263
      %vm266 = vcmask 130048
      %v268 = vsel %vm266, %v265, 0
      %270 = vmatprep.subr.bf16.mxu0 0
      %271 = vmatpush1.bf16.msra.mxu0 %v258
      %272 = vmatprep.subr.bf16.mxu0 0
      %273 = vmatpush1.bf16.msra.mxu0 0
      %274 = vmatprep.subr.bf16.mxu0 0
      %275 = vmatpush1.bf16.msra.mxu0 0
      %276 = vmatprep.subr.bf16.mxu0 0
      %277 = vmatpush1.bf16.msra.mxu0 0
      %278 = vmatprep.subr.bf16.mxu0 0
      %279 = vmatpush1.bf16.msra.mxu0 0
      %280 = vmatprep.subr.bf16.mxu0 0
      %281 = vmatpush1.bf16.msra.mxu0 0
      %282 = vmatprep.subr.bf16.mxu0 0
      %283 = vmatpush1.bf16.msra.mxu0 0
      %284 = vmatprep.subr.bf16.mxu0 0
      %285 = vmatpush1.bf16.msra.mxu0 0
      %286 = vmatprep.subr.bf16.mxu0 0
      %287 = vmatpush1.bf16.msra.mxu0 0
      %288 = vmatprep.subr.bf16.mxu0 0
      %289 = vmatpush1.bf16.msra.mxu0 0
      %290 = vmatprep.subr.bf16.mxu0 0
      %291 = vmatpush1.bf16.msra.mxu0 0
      %292 = vmatprep.subr.bf16.mxu0 0
      %293 = vmatpush1.bf16.msra.mxu0 0
      %294 = vmatprep.subr.bf16.mxu0 0
      %295 = vmatpush1.bf16.msra.mxu0 0
      %296 = vmatprep.subr.bf16.mxu0 0
      %297 = vmatpush1.bf16.msra.mxu0 0
      %298 = vmatprep.subr.bf16.mxu0 0
      %299 = vmatpush1.bf16.msra.mxu0 0
      %300 = vmatprep.subr.bf16.mxu0 0
      %301 = vmatpush1.bf16.msra.mxu0 0
      %302 = vmatprep.mubr.bf16.mxu0 0
      %303 = vmatmul.mubr.bf16.gmra.mrb[0].mxu0 %v268
      %v304 = vpop.f32.mrb[0].mxu0
      %v305 = vadd.f32 0.0, %v304
      %v306 = vpop.f32.mrb[0].mxu0
      %v307 = vpop.f32.mrb[0].mxu0
      %v308 = vadd.f32 0.0, %v307
      %v309 = vpop.f32.mrb[0].mxu0
      %310 = vdwg.mxu0
      %s311 = scalar_lea.vmem %s1, 8
      %v312 = vld [vmem:[%s311] sm:$0xf]
      %v313 = vld [vmem:[%s311 + $0x4] sm:$0xf]
      %v316 = vunpack.c.l.b16 %v312
      %v317 = vunpack.c.l.b16 %v313
      %v318 = vpack.c.b16 %v317, %v316
      %v320 = vsel %vm266, %v318, 0
      %322 = vmatprep.subr.bf16.mxu0 0
      %323 = vmatpush1.bf16.msra.mxu0 %v258
      %324 = vmatprep.subr.bf16.mxu0 0
      %325 = vmatpush1.bf16.msra.mxu0 0
      %326 = vmatprep.subr.bf16.mxu0 0
      %327 = vmatpush1.bf16.msra.mxu0 0
      %328 = vmatprep.subr.bf16.mxu0 0
      %329 = vmatpush1.bf16.msra.mxu0 0
      %330 = vmatprep.subr.bf16.mxu0 0
      %331 = vmatpush1.bf16.msra.mxu0 0
      %332 = vmatprep.subr.bf16.mxu0 0
      %333 = vmatpush1.bf16.msra.mxu0 0
      %334 = vmatprep.subr.bf16.mxu0 0
      %335 = vmatpush1.bf16.msra.mxu0 0
      %336 = vmatprep.subr.bf16.mxu0 0
      %337 = vmatpush1.bf16.msra.mxu0 0
      %338 = vmatprep.subr.bf16.mxu0 0
      %339 = vmatpush1.bf16.msra.mxu0 0
      %340 = vmatprep.subr.bf16.mxu0 0
      %341 = vmatpush1.bf16.msra.mxu0 0
      %342 = vmatprep.subr.bf16.mxu0 0
      %343 = vmatpush1.bf16.msra.mxu0 0
      %344 = vmatprep.subr.bf16.mxu0 0
      %345 = vmatpush1.bf16.msra.mxu0 0
      %346 = vmatprep.subr.bf16.mxu0 0
      %347 = vmatpush1.bf16.msra.mxu0 0
      %348 = vmatprep.subr.bf16.mxu0 0
      %349 = vmatpush1.bf16.msra.mxu0 0
      %350 = vmatprep.subr.bf16.mxu0 0
      %351 = vmatpush1.bf16.msra.mxu0 0
      %352 = vmatprep.subr.bf16.mxu0 0
      %353 = vmatpush1.bf16.msra.mxu0 0
      %354 = vmatprep.mubr.bf16.mxu0 0
      %355 = vmatmul.mubr.bf16.gmra.mrb[0].mxu0 %v320
      %v356 = vpop.f32.mrb[0].mxu0
      %v357 = vadd.f32 0.0, %v356
      %v358 = vpop.f32.mrb[0].mxu0
      %v359 = vpop.f32.mrb[0].mxu0
      %v360 = vadd.f32 0.0, %v359
      %v361 = vpop.f32.mrb[0].mxu0
      %362 = vdwg.mxu0
      %s363 = scalar_lea.vmem %s1, 16
      %v364 = vld [vmem:[%s363] sm:$0xf]
      %v365 = vld [vmem:[%s363 + $0x4] sm:$0xf]
      %v368 = vunpack.c.l.b16 %v364
      %v369 = vunpack.c.l.b16 %v365
      %v370 = vpack.c.b16 %v369, %v368
      %v372 = vsel %vm266, %v370, 0
      %374 = vmatprep.subr.bf16.mxu0 0
      %375 = vmatpush1.bf16.msra.mxu0 %v258
      %376 = vmatprep.subr.bf16.mxu0 0
      %377 = vmatpush1.bf16.msra.mxu0 0
      %378 = vmatprep.subr.bf16.mxu0 0
      %379 = vmatpush1.bf16.msra.mxu0 0
      %380 = vmatprep.subr.bf16.mxu0 0
      %381 = vmatpush1.bf16.msra.mxu0 0
      %382 = vmatprep.subr.bf16.mxu0 0
      %383 = vmatpush1.bf16.msra.mxu0 0
      %384 = vmatprep.subr.bf16.mxu0 0
      %385 = vmatpush1.bf16.msra.mxu0 0
      %386 = vmatprep.subr.bf16.mxu0 0
      %387 = vmatpush1.bf16.msra.mxu0 0
      %388 = vmatprep.subr.bf16.mxu0 0
      %389 = vmatpush1.bf16.msra.mxu0 0
      %390 = vmatprep.subr.bf16.mxu0 0
      %391 = vmatpush1.bf16.msra.mxu0 0
      %392 = vmatprep.subr.bf16.mxu0 0
      %393 = vmatpush1.bf16.msra.mxu0 0
      %394 = vmatprep.subr.bf16.mxu0 0
      %395 = vmatpush1.bf16.msra.mxu0 0
      %396 = vmatprep.subr.bf16.mxu0 0
      %397 = vmatpush1.bf16.msra.mxu0 0
      %398 = vmatprep.subr.bf16.mxu0 0
      %399 = vmatpush1.bf16.msra.mxu0 0
      %400 = vmatprep.subr.bf16.mxu0 0
      %401 = vmatpush1.bf16.msra.mxu0 0
      %402 = vmatprep.subr.bf16.mxu0 0
      %403 = vmatpush1.bf16.msra.mxu0 0
      %404 = vmatprep.subr.bf16.mxu0 0
      %405 = vmatpush1.bf16.msra.mxu0 0
      %406 = vmatprep.mubr.bf16.mxu0 0
      %407 = vmatmul.mubr.bf16.gmra.mrb[0].mxu0 %v372
      %v408 = vpop.f32.mrb[0].mxu0
      %v409 = vadd.f32 0.0, %v408
      %v410 = vpop.f32.mrb[0].mxu0
      %v411 = vpop.f32.mrb[0].mxu0
      %v412 = vadd.f32 0.0, %v411
      %v413 = vpop.f32.mrb[0].mxu0
      %414 = vdwg.mxu0
      %v415 = vlaneseq
      %v416 = vand.u32 %v415, 127
      %vm417 = vcmask 1047680
      %418 = vrot.lane.b32.xlu0 %v305, 16
      %v419 = vpop.permute.xlu0 %418
      %v420 = vsel %vm417, %v419, %v305
      %421 = vrot.lane.b32.xlu0 %v308, 16
      %v422 = vpop.permute.xlu0 %421
      %v423 = vsel %vm417, %v422, %v308
      %424 = vrot.lane.b32.xlu0 %v420, 16
      %v425 = vpop.permute.xlu0 %424
      %426 = vrot.lane.b32.xlu0 %v423, 16
      %v427 = vpop.permute.xlu0 %426
      %v428 = vsel %vm417, %v425, %v305
      %v429 = vsel %vm417, %v427, %v308
      %430 = vrot.lane.b32.xlu0 %v409, 16
      %v431 = vpop.permute.xlu0 %430
      %v432 = vsel %vm417, %v431, %v409
      %433 = vrot.lane.b32.xlu0 %v412, 16
      %v434 = vpop.permute.xlu0 %433
      %v435 = vsel %vm417, %v434, %v412
      %436 = vrot.lane.b32.xlu0 %v432, 16
      %v437 = vpop.permute.xlu0 %436
      %438 = vrot.lane.b32.xlu0 %v435, 16
      %v439 = vpop.permute.xlu0 %438
      %v440 = vsel %vm417, %v437, %v409
      %v441 = vsel %vm417, %v439, %v412
      %vm442 = vcmp.ge.s32.totalorder %v416, 1
      %445 = vrot.lane.b32.xlu0 %v428, 113
      %v446 = vpop.permute.xlu0 %445
      %447 = vrot.lane.b32.xlu0 %v429, 113
      %v448 = vpop.permute.xlu0 %447
      %v451 = vsel %vm442, %v446, 0.0
      %v452 = vsel %vm442, %v448, 0.0
      %v453 = vadd.f32 %v451, %v357
      %v454 = vadd.f32 %v452, %v360
      %vm455 = vcmp.le.s32.totalorder %v416, 14
      %458 = vrot.lane.b32.xlu0 %v440, 127
      %v459 = vpop.permute.xlu0 %458
      %460 = vrot.lane.b32.xlu0 %v441, 127
      %v461 = vpop.permute.xlu0 %460
      %v464 = vsel %vm455, %v459, 0.0
      %v465 = vsel %vm455, %v461, 0.0
      %v466 = vadd.f32 %v453, %v464
      %v467 = vadd.f32 %v454, %v465
      %468 = vst.msk [vmem:[%s212] sm:$0xff] %vm266, %v466
      %469 = vst.msk [vmem:[%s212 + $0x8] sm:$0xff] %vm266, %v467
      %v470 = vsel %vm266, %v466, 0.0
      %471 = vadd.xlane.f32.xlu0 %v470
      %v472 = vpop.xlane.xlu0 %471
      %v473 = vsel %vm266, %v467, 0.0
      %474 = vadd.xlane.f32.xlu0 %v473
      %v475 = vpop.xlane.xlu0 %474
      %vm476 = vcmask 7168
      %477 = vst.msk [vmem:[%s217] sm:$0xff] %vm476, %v472
      %478 = vst.msk [vmem:[%s217 + $0x8] sm:$0xff] %vm476, %v475
      %v479 = vmul.f32 %v466, %v466
      %v480 = vmul.f32 %v467, %v467
      %v481 = vsel %vm266, %v479, 0.0
      %482 = vadd.xlane.f32.xlu0 %v481
      %v483 = vpop.xlane.xlu0 %482
      %v484 = vsel %vm266, %v480, 0.0
      %485 = vadd.xlane.f32.xlu0 %v484
      %v486 = vpop.xlane.xlu0 %485
      %487 = vst.msk [vmem:[%s222] sm:$0xff] %vm476, %v483
      %488 = vst.msk [vmem:[%s222 + $0x8] sm:$0xff] %vm476, %v486
      %p489 = scmp.lt.s32.totalorder %s16, 1
      %s490 = scalar_select %p489, %s16, 1
      %s491 = smul.addr %s490, 2
      %s492 = smul.addr %s491, 8
      %s493 = scalar_lea.vmem %s2, %s492
      %p494 = scmp.lt.s32.totalorder %s16, 1
      %s495 = scalar_select %p494, %s16, 1
      %s496 = smul.addr %s495, 2
      %s497 = smul.addr %s496, 8
      %s498 = scalar_lea.vmem %s3, %s497
      %p499 = scmp.lt.s32.totalorder %s16, 1
      %s500 = scalar_select %p499, %s16, 1
      %s501 = smul.addr %s500, 2
      %s502 = smul.addr %s501, 8
      %s503 = scalar_lea.vmem %s4, %s502
      // Predicated region
      $region29: #{cnn_layer_forward.2} parent=27 // pred_check
        %p504 = pneg %p81
      $region30: #{cnn_layer_forward.2} parent=27 // pred_check_branch
        %506 = sbr.rel (%p504) target = $region32
      $region31: #{cnn_layer_forward.2} parent=27 // pred_region
        _
      $region32: #{cnn_layer_forward.2} parent=27 // pred_fallthru
        _
      // Predicated region
      $region33: #{cnn_layer_forward.2} parent=27 // pred_check
        %p507 = pneg %p107
      $region34: #{cnn_layer_forward.2} parent=27 // pred_check_branch
        %509 = sbr.rel (%p507) target = $region36
      $region35: #{cnn_layer_forward.2} parent=27 // pred_region
        _
      $region36: #{cnn_layer_forward.2} parent=27 // pred_fallthru
        _
      // Predicated region
      $region37: #{cnn_layer_forward.2} parent=27 // pred_check
        %p510 = pneg %p133
      $region38: #{cnn_layer_forward.2} parent=27 // pred_check_branch
        %512 = sbr.rel (%p510) target = $region40
      $region39: #{cnn_layer_forward.2} parent=27 // pred_region
        _
      $region40: #{cnn_layer_forward.2} parent=27 // pred_fallthru
        _
    $region28: #{cnn_layer_forward.2} parent=5 // pred_fallthru
      _
    %p513 = scmp.le.s32.totalorder 2, %s11
    // Predicated region
    $region41: #{cnn_layer_forward.2} parent=5 // pred_check
      %p514 = pneg %p513
    $region42: #{cnn_layer_forward.2} parent=5 // pred_check_branch
      %516 = sbr.rel (%p514) target = $region44
    $region43: #{cnn_layer_forward.2} parent=5 // pred_region
      %s517 = ssub.s32 %s11, 2
      // Predicated region
      $region45: #{cnn_layer_forward.2} parent=43 // pred_check
        %p518 = pneg %p87
      $region46: #{cnn_layer_forward.2} parent=43 // pred_check_branch
        %520 = sbr.rel (%p518) target = $region48
      $region47: #{cnn_layer_forward.2} parent=43 // pred_region
        %p521 = scmp.lt.s32.totalorder %s17, 1
        %s522 = scalar_select %p521, %s17, 1
        %s523 = smul.addr %s522, 2
        %s524 = smul.addr %s523, 8
        %s525 = scalar_lea.vmem %s2, %s524
      $region48: #{cnn_layer_forward.2} parent=43 // pred_fallthru
        _
      // Predicated region
      $region49: #{cnn_layer_forward.2} parent=43 // pred_check
        %p526 = pneg %p113
      $region50: #{cnn_layer_forward.2} parent=43 // pred_check_branch
        %528 = sbr.rel (%p526) target = $region52
      $region51: #{cnn_layer_forward.2} parent=43 // pred_region
        %p529 = scmp.lt.s32.totalorder %s17, 1
        %s530 = scalar_select %p529, %s17, 1
        %s531 = smul.addr %s530, 2
        %s532 = smul.addr %s531, 8
        %s533 = scalar_lea.vmem %s3, %s532
      $region52: #{cnn_layer_forward.2} parent=43 // pred_fallthru
        _
      // Predicated region
      $region53: #{cnn_layer_forward.2} parent=43 // pred_check
        %p534 = pneg %p139
      $region54: #{cnn_layer_forward.2} parent=43 // pred_check_branch
        %536 = sbr.rel (%p534) target = $region56
      $region55: #{cnn_layer_forward.2} parent=43 // pred_region
        %p537 = scmp.lt.s32.totalorder %s17, 1
        %s538 = scalar_select %p537, %s17, 1
        %s539 = smul.addr %s538, 2
        %s540 = smul.addr %s539, 8
        %s541 = scalar_lea.vmem %s4, %s540
      $region56: #{cnn_layer_forward.2} parent=43 // pred_fallthru
        _
    $region44: #{cnn_layer_forward.2} parent=5 // pred_fallthru
      _
  $region6: #{cnn_layer_forward.2} parent=0 // loop_footer
    %s15 = sadd.s32 1, %s11
  $region7: #{cnn_layer_forward.2} parent=0 // loop_footer_branch
    %10 = sbr.rel target = $region3
  $region8: #{cnn_layer_forward.2} parent=0 // loop_exit
    _

</llo_original>
